<compile_context>
chip_gen: v5e
topology: v5e:2x2
jax: 0.10.0
libtpu: 0.0.40
codegen_flags: <defaults>
</compile_context>

<pallas_src>
import functools

import jax
import jax.numpy as jnp
from jax.experimental import pallas as pl
from jax.experimental.pallas import tpu as pltpu


# ---------------------------------------------------------------------------
# Kernels
# ---------------------------------------------------------------------------

def _pool_kernel(x_ref, sum_ref, *, hw_tile, hw_total, tiles_per_core, need_mask):
    """Accumulate the per-(b, c) spatial sum of one lane-dense HW tile.

    x_ref:   (B, Ct, hw_tile) in the input's native dtype.
    sum_ref: (1, B, Ct) f32 partial-sum accumulator, resident across the
             HW-tile (last, "arbitrary") grid axis for one (C-tile, core) pair.
    """
    t = pl.program_id(2)

    @pl.when(t == 0)
    def _():
        sum_ref[...] = jnp.zeros_like(sum_ref)

    x = x_ref[...]
    if need_mask:
        # Global spatial index of each lane in this tile; zero lanes that fall
        # past H*W (partial last tile) or that belong to a padded grid step of
        # the megacore split (its *unclamped* start is already >= H*W).
        g = pl.program_id(1) * tiles_per_core + t
        lane = jax.lax.broadcasted_iota(jnp.int32, (1, 1, hw_tile), 2)
        x = jnp.where(g * hw_tile + lane < hw_total, x, 0)

    # The cast folds into the reduction: accumulate in f32 regardless of dtype.
    sum_ref[...] += jnp.sum(x, axis=-1, dtype=jnp.float32)[None]


def _scale_kernel(x_ref, gate_ref, o_ref):
    """o = x * gate; gate pre-shaped (B, Ct, 1) in x's dtype -> lane broadcast only."""
    o_ref[...] = x_ref[...] * gate_ref[...]


def _fused_kernel(x_ref, w1t_ref, w2t_ref, o_ref, *, hw_total):
    """Whole-tensor-in-VMEM fast path: pool + excitation + scale in one pass."""
    x = x_ref[...]                                                     # (B, C, HW)
    pooled = jnp.sum(x, axis=-1, dtype=jnp.float32) * (1.0 / hw_total)  # (B, C)
    h = jnp.dot(pooled, w1t_ref[...].astype(jnp.float32),
                preferred_element_type=jnp.float32)
    h = jnp.maximum(h, 0.0)
    z = jnp.dot(h, w2t_ref[...].astype(jnp.float32),
                preferred_element_type=jnp.float32)
    gate = 1.0 / (1.0 + jnp.exp(-z))                                   # sigmoid
    o_ref[...] = x * gate.astype(x.dtype)[:, :, None]


# ---------------------------------------------------------------------------
# Chip-aware budgets & tiling
# ---------------------------------------------------------------------------

def _chip_budgets():
    """(per-slab tile budget, scoped-VMEM limit, fused-path x-size limit) bytes."""
    mib = 1024 * 1024
    vmem_cap = None
    try:
        vmem_cap = int(pltpu.get_tpu_info().vmem_capacity_bytes)
    except Exception:
        vmem_cap = None
    if vmem_cap is None or vmem_cap <= 80 * mib:
        # v7x-class (64 MiB physical VMEM per core) or unknown: stay conservative.
        return 8 * mib, 48 * mib, 12 * mib
    # v5e / v6e: 128 MiB physical VMEM.
    return 8 * mib, 64 * mib, 24 * mib


def _pick_tiling(B, C, HW, itemsize, budget_bytes):
    """Choose (c_tile, hw_tile).  hw_tile is lane-dense (multiple of 128).
    C is only tiled (in multiples of 128, keeping the pooled-output block
    lane-dense) when even a minimum 128-lane slab with the full C would blow
    the per-block budget — this keeps HW tiles, and hence per-(b,c)-row DMA
    segments, as large as possible."""
    hw_cap = int(pl.cdiv(HW, 128)) * 128
    if B * C * 128 * itemsize > budget_bytes and C > 128:
        c_tile = (budget_bytes // max(1, B * 128 * itemsize)) // 128 * 128
        c_tile = int(min(max(128, c_tile), (C // 128) * 128))
    else:
        c_tile = C
    # TODO(synk): a huge batch with c_tile == 128 can still exceed the budget;
    # that regime would additionally need a B-tiling grid axis.
    hw_tile = (budget_bytes // max(1, B * c_tile * itemsize)) // 128 * 128
    hw_tile = int(min(max(128, hw_tile), hw_cap))
    return c_tile, hw_tile


# ---------------------------------------------------------------------------
# Public wrapper
# ---------------------------------------------------------------------------

@functools.partial(jax.jit, static_argnames=("hw_tile", "c_tile", "fuse"))
def se_block(x, w1, w2, *, hw_tile=None, c_tile=None, fuse=None):
    """SEBlock forward.  x: (B, C, H, W); w1: (C//r, C); w2: (C, C//r)
    (PyTorch nn.Linear weight layout, bias-free)."""
    B, C, H, W = x.shape
    HW = H * W
    itemsize = jnp.dtype(x.dtype).itemsize
    x_bytes = B * C * HW * itemsize
    assert w1.shape[1] == C and w2.shape[0] == C, "weight shapes must match channels"

    slab_budget, vmem_limit, fuse_limit = _chip_budgets()
    x3 = x.reshape(B, C, HW)  # free view

    # ---- Fast path: whole tensor comfortably fits in VMEM -> one fused pass.
    use_fused = fuse if fuse is not None else (x_bytes <= fuse_limit)
    if use_fused:
        out3 = pl.pallas_call(
            functools.partial(_fused_kernel, hw_total=HW),
            out_shape=jax.ShapeDtypeStruct((B, C, HW), x.dtype),
            compiler_params=pltpu.CompilerParams(vmem_limit_bytes=vmem_limit),
            cost_estimate=pl.CostEstimate(
                flops=2 * B * C * HW + 4 * B * C * w1.shape[0],
                transcendentals=B * C,
                bytes_accessed=2 * x_bytes + (w1.size + w2.size) * itemsize),
        )(x3, w1.T, w2.T)
        return out3.reshape(B, C, H, W)

    # ---- Streaming two-pass path -------------------------------------------
    auto_c, auto_hw = _pick_tiling(B, C, HW, itemsize, slab_budget)
    c_tile = int(c_tile) if c_tile is not None else auto_c
    hw_tile = int(hw_tile) if hw_tile is not None else auto_hw
    assert hw_tile % 128 == 0, "hw_tile must be a multiple of the 128-lane width"
    assert c_tile == C or (c_tile % 128 == 0 and c_tile <= C), \
        "c_tile must equal C or be a multiple of 128"

    num_c = int(pl.cdiv(C, c_tile))
    num_t = int(pl.cdiv(HW, hw_tile))

    # Megacore split of the pool reduction: each "core" slice reduces its own
    # run of HW tiles into a private partial-sum slab (on v5e/v6e the extra
    # parallel axis just iterates; on v7x it shards across the 2 TensorCores).
    ncores = 2 if num_t >= 2 else 1
    tiles_per_core = int(pl.cdiv(num_t, ncores))
    padded_grid = ncores * tiles_per_core != num_t
    need_mask = (num_t * hw_tile != HW) or padded_grid

    if padded_grid:
        # Clamp the DMA of the padded grid step to a valid tile; its
        # contribution is masked to zero in-kernel (unclamped start >= H*W).
        def x_pool_map(ci, core, t):
            return (0, ci, jnp.minimum(core * tiles_per_core + t, num_t - 1))
    else:
        def x_pool_map(ci, core, t):
            return (0, ci, core * tiles_per_core + t)

    # --- Pass 1: spatial sums, accumulated across HW tiles per (C-tile, core).
    pooled_parts = pl.pallas_call(
        functools.partial(_pool_kernel, hw_tile=hw_tile, hw_total=HW,
                          tiles_per_core=tiles_per_core, need_mask=need_mask),
        out_shape=jax.ShapeDtypeStruct((ncores, B, C), jnp.float32),
        grid=(num_c, ncores, tiles_per_core),
        in_specs=[pl.BlockSpec((B, c_tile, hw_tile), x_pool_map)],
        out_specs=pl.BlockSpec((1, B, c_tile), lambda ci, core, t: (core, 0, ci)),
        compiler_params=pltpu.CompilerParams(
            dimension_semantics=("parallel", "parallel", "arbitrary"),
            vmem_limit_bytes=vmem_limit),
        cost_estimate=pl.CostEstimate(
            flops=B * C * HW, transcendentals=0,
            bytes_accessed=x_bytes + ncores * B * C * 4),
    )(x3)

    # --- Excitation: tiny FC -> ReLU -> FC -> sigmoid, exactly once, in f32.
    pooled = pooled_parts.sum(axis=0) * (1.0 / HW)       # mean over the TRUE H*W
    h = jnp.maximum(pooled @ w1.T.astype(jnp.float32), 0.0)
    gate = jax.nn.sigmoid(h @ w2.T.astype(jnp.float32)).astype(x.dtype)
    gate3 = gate.reshape(B, C, 1)  # pre-shaped: pass 2 only lane-broadcasts

    # --- Pass 2: stream x tiles and scale by the resident channel gate.
    out3 = pl.pallas_call(
        _scale_kernel,
        out_shape=jax.ShapeDtypeStruct((B, C, HW), x.dtype),
        grid=(num_c, num_t),
        in_specs=[pl.BlockSpec((B, c_tile, hw_tile), lambda ci, t: (0, ci, t)),
                  pl.BlockSpec((B, c_tile, 1), lambda ci, t: (0, ci, 0))],
        out_specs=pl.BlockSpec((B, c_tile, hw_tile), lambda ci, t: (0, ci, t)),
        compiler_params=pltpu.CompilerParams(
            dimension_semantics=("parallel", "parallel"),
            vmem_limit_bytes=vmem_limit),
        cost_estimate=pl.CostEstimate(
            flops=B * C * HW, transcendentals=0,
            bytes_accessed=2 * x_bytes + B * C * itemsize),
    )(x3, gate3)

    return out3.reshape(B, C, H, W)


def se_block_ref(x, w1, w2):
    """Pure-JAX reference mirroring the PyTorch module."""
    y = jnp.mean(x, axis=(2, 3))                     # AdaptiveAvgPool2d(1)
    y = jnp.maximum(y @ w1.T, 0.0)                   # Linear + ReLU
    y = jax.nn.sigmoid(y @ w2.T)                     # Linear + Sigmoid
    return x * y[:, :, None, None]


if __name__ == "__main__":
    key = jax.random.PRNGKey(0)

    def make_inputs(tag, B, C, H, W, reduction=16):
        kx, k1, k2 = jax.random.split(jax.random.fold_in(key, tag), 3)
        Cr = max(1, C // reduction)
        x = jax.random.normal(kx, (B, C, H, W), dtype=jnp.float32)
        w1 = jax.random.normal(k1, (Cr, C), dtype=jnp.float32) * (1.0 / jnp.sqrt(C))
        w2 = jax.random.normal(k2, (C, Cr), dtype=jnp.float32) * (1.0 / jnp.sqrt(Cr))
        return x, w1, w2

    def check(out, x, w1, w2):
        ref = jax.block_until_ready(se_block_ref(x, w1, w2))
        assert out.shape == x.shape and out.dtype == x.dtype
        assert jnp.allclose(out, ref, atol=1e-5, rtol=1e-5), "mismatch vs reference"

    # 1) Small feature map -> fused single-pass fast path (whole tensor in VMEM).
    x, w1, w2 = make_inputs(0, 2, 32, 16, 16)
    check(jax.block_until_ready(se_block(x, w1, w2)), x, w1, w2)

    # 2) Same input, streaming two-pass path with a single HW tile (no masking).
    check(jax.block_until_ready(se_block(x, w1, w2, fuse=False)), x, w1, w2)

    # 3) Streaming path with 3 HW tiles: exercises the resident-accumulator
    #    reduction and the 2-way core split with an odd tile count (clamped +
    #    masked padded grid step).
    x, w1, w2 = make_inputs(1, 2, 32, 16, 24)
    check(jax.block_until_ready(se_block(x, w1, w2, fuse=False, hw_tile=128)),
          x, w1, w2)

    # 4) Non-multiple-of-128 spatial size (7x7) + forced channel tiling:
    #    exercises the in-kernel partial-tile mask and the C-tiled grids
    #    (partial output blocks are store-masked by Pallas; no padding copies).
    x, w1, w2 = make_inputs(2, 2, 256, 7, 7)
    check(jax.block_until_ready(se_block(x, w1, w2, fuse=False, c_tile=128)),
          x, w1, w2)

    print("KERNEL_OK")
</pallas_src>

<mosaic_0001>
module attributes {stable_mosaic.version = 11 : i64} {
  func.func @_fused_kernel(%arg0: memref<2x32x256xf32, #tpu.memory_space<vmem>>, %arg1: memref<32x2xf32, #tpu.memory_space<vmem>>, %arg2: memref<2x32xf32, #tpu.memory_space<vmem>>, %arg3: memref<2x32x256xf32, #tpu.memory_space<vmem>>) attributes {dimension_semantics = [], scalar_prefetch = 0 : i64, scratch_operands = 0 : i64, tpu.core_type = #tpu.core_type<tc>} {
    %c0 = arith.constant 0 : index
    %c0_0 = arith.constant 0 : index
    %c0_1 = arith.constant 0 : index
    %0 = vector.load %arg0[%c0, %c0_0, %c0_1] : memref<2x32x256xf32, #tpu.memory_space<vmem>>, vector<2x32x256xf32>
    %cst = arith.constant dense<0.000000e+00> : vector<2x32xf32>
    %1 = vector.multi_reduction <add>, %0, %cst [2] : vector<2x32x256xf32> to vector<2x32xf32>
    %cst_2 = arith.constant 3.906250e-03 : f32
    %2 = vector.broadcast %cst_2 : f32 to vector<2x32xf32>
    %3 = arith.mulf %1, %2 : vector<2x32xf32>
    %c0_3 = arith.constant 0 : index
    %c0_4 = arith.constant 0 : index
    %4 = vector.load %arg1[%c0_3, %c0_4] : memref<32x2xf32, #tpu.memory_space<vmem>>, vector<32x2xf32>
    %cst_5 = arith.constant dense<0.000000e+00> : vector<2x2xf32>
    %5 = tpu.matmul %3, %4, %cst_5 {dimension_numbers = #tpu.dot_dimension_numbers<[1], [0], [0], [1], [0, 0, 1, 1], [], []>} : vector<2x32xf32>, vector<32x2xf32>, vector<2x2xf32> -> vector<2x2xf32>
    %cst_6 = arith.constant 0.000000e+00 : f32
    %6 = vector.broadcast %cst_6 : f32 to vector<2x2xf32>
    %7 = arith.maximumf %5, %6 : vector<2x2xf32>
    %c0_7 = arith.constant 0 : index
    %c0_8 = arith.constant 0 : index
    %8 = vector.load %arg2[%c0_7, %c0_8] : memref<2x32xf32, #tpu.memory_space<vmem>>, vector<2x32xf32>
    %cst_9 = arith.constant dense<0.000000e+00> : vector<2x32xf32>
    %9 = tpu.matmul %7, %8, %cst_9 {dimension_numbers = #tpu.dot_dimension_numbers<[1], [0], [0], [1], [0, 0, 1, 1], [], []>} : vector<2x2xf32>, vector<2x32xf32>, vector<2x32xf32> -> vector<2x32xf32>
    %cst_10 = arith.constant 0.000000e+00 : f32
    %10 = vector.broadcast %cst_10 : f32 to vector<2x32xf32>
    %11 = arith.subf %10, %9 : vector<2x32xf32>
    %12 = math.exp %11 : vector<2x32xf32>
    %cst_11 = arith.constant 1.000000e+00 : f32
    %13 = vector.broadcast %cst_11 : f32 to vector<2x32xf32>
    %14 = arith.addf %13, %12 : vector<2x32xf32>
    %cst_12 = arith.constant 1.000000e+00 : f32
    %15 = vector.broadcast %cst_12 : f32 to vector<2x32xf32>
    %16 = arith.divf %15, %14 : vector<2x32xf32>
    %17 = vector.shape_cast %16 : vector<2x32xf32> to vector<2x32x1xf32>
    %18 = vector.broadcast %17 : vector<2x32x1xf32> to vector<2x32x256xf32>
    %19 = arith.mulf %0, %18 : vector<2x32x256xf32>
    %c0_13 = arith.constant 0 : index
    %c0_14 = arith.constant 0 : index
    %c0_15 = arith.constant 0 : index
    %20 = vector.load %arg3[%c0_13, %c0_14, %c0_15] : memref<2x32x256xf32, #tpu.memory_space<vmem>>, vector<2x32x256xf32>
    tpu.vector_store %arg3[%c0_13, %c0_14, %c0_15], %19 {strides = array<i32>} : memref<2x32x256xf32, #tpu.memory_space<vmem>>, vector<2x32x256xf32>,
    return
  }
}

</mosaic_0001>

<llo_original>
// kernel: se_block.1
$region0: #{se_block.1}
  #allocation0 [shape = 'u32[]', space=smem, size = 0x4, offset = 0x4, fixed_abs, tag = 'smem constant byte address 0x4 - core index']
  #allocation1 [shape = 'u32[72,128]{1,0:T(1,128)}', space=vmem, size = 0x9000, scoped, tag = 'internal scratch']
  %s0 = inlined_call_operand.vmem [shape: f32[2,32,256], index: 0, kind: input, shape index: {}]
  %s1 = inlined_call_operand.vmem [shape: f32[32,2], index: 1, kind: input, shape index: {}]
  %s2 = inlined_call_operand.vmem [shape: f32[2,32], index: 2, kind: input, shape index: {}]
  %s3 = inlined_call_operand.vmem [shape: f32[2,32,256], index: 3, kind: output, shape index: {}]
  %s4 = sld [smem:[#allocation0]]
  $region22: #{se_block.1} parent=0
    _
  %s6 = ssub.s32 1, %s4
  %s7 = scalar_select 0, %s6, %s4
  // Predicated region
  $region2: #{se_block.1} parent=0 // pred_check
    _
  $region3: #{se_block.1} parent=0 // pred_check_branch
    %9 = sbr.rel (0) target = $region5
  $region4: #{se_block.1} parent=0 // pred_region
    _
  $region5: #{se_block.1} parent=0 // pred_fallthru
    _
  // Predicated region
  $region6: #{se_block.1} parent=0 // pred_check
    _
  $region7: #{se_block.1} parent=0 // pred_check_branch
    %11 = sbr.rel (0) target = $region9
  $region8: #{se_block.1} parent=0 // pred_region
    _
  $region9: #{se_block.1} parent=0 // pred_fallthru
    _
  // Predicated region
  $region10: #{se_block.1} parent=0 // pred_check
    _
  $region11: #{se_block.1} parent=0 // pred_check_branch
    %13 = sbr.rel (0) target = $region13
  $region12: #{se_block.1} parent=0 // pred_region
    _
  $region13: #{se_block.1} parent=0 // pred_fallthru
    _
  %v14 = vld [vmem:[%s0] sm:$0xff]
  %v15 = vld [vmem:[%s0 + $0x8] sm:$0xff]
  %v16 = vld [vmem:[%s0 + $0x10] sm:$0xff]
  %v17 = vld [vmem:[%s0 + $0x18] sm:$0xff]
  %v18 = vld [vmem:[%s0 + $0x20] sm:$0xff]
  %v19 = vld [vmem:[%s0 + $0x28] sm:$0xff]
  %v20 = vld [vmem:[%s0 + $0x30] sm:$0xff]
  %v21 = vld [vmem:[%s0 + $0x38] sm:$0xff]
  %v22 = vld [vmem:[%s0 + $0x40] sm:$0xff]
  %v23 = vld [vmem:[%s0 + $0x48] sm:$0xff]
  %v24 = vld [vmem:[%s0 + $0x50] sm:$0xff]
  %v25 = vld [vmem:[%s0 + $0x58] sm:$0xff]
  %v26 = vld [vmem:[%s0 + $0x60] sm:$0xff]
  %v27 = vld [vmem:[%s0 + $0x68] sm:$0xff]
  %v28 = vld [vmem:[%s0 + $0x70] sm:$0xff]
  %v29 = vld [vmem:[%s0 + $0x78] sm:$0xff]
  %v30 = vadd.f32 %v14, %v15
  %31 = vadd.xlane.f32.xlu0 %v30
  %v32 = vpop.xlane.xlu0 %31
  %v33 = vadd.f32 %v16, %v17
  %34 = vadd.xlane.f32.xlu0 %v33
  %v35 = vpop.xlane.xlu0 %34
  %v36 = vadd.f32 %v18, %v19
  %37 = vadd.xlane.f32.xlu0 %v36
  %v38 = vpop.xlane.xlu0 %37
  %v39 = vadd.f32 %v20, %v21
  %40 = vadd.xlane.f32.xlu0 %v39
  %v41 = vpop.xlane.xlu0 %40
  %v42 = vadd.f32 %v22, %v23
  %43 = vadd.xlane.f32.xlu0 %v42
  %v44 = vpop.xlane.xlu0 %43
  %v45 = vadd.f32 %v24, %v25
  %46 = vadd.xlane.f32.xlu0 %v45
  %v47 = vpop.xlane.xlu0 %46
  %v48 = vadd.f32 %v26, %v27
  %49 = vadd.xlane.f32.xlu0 %v48
  %v50 = vpop.xlane.xlu0 %49
  %v51 = vadd.f32 %v28, %v29
  %52 = vadd.xlane.f32.xlu0 %v51
  %v53 = vpop.xlane.xlu0 %52
  %v54 = vmul.f32 %v32, 0.00390625
  %v55 = vmul.f32 %v35, 0.00390625
  %v56 = vmul.f32 %v38, 0.00390625
  %v57 = vmul.f32 %v41, 0.00390625
  %v58 = vmul.f32 %v44, 0.00390625
  %v59 = vmul.f32 %v47, 0.00390625
  %v60 = vmul.f32 %v50, 0.00390625
  %v61 = vmul.f32 %v53, 0.00390625
  %v62 = vld [vmem:[%s1] sm:$0xff]
  %v63 = vld [vmem:[%s1 + $0x8] sm:$0xff]
  %v64 = vld [vmem:[%s1 + $0x10] sm:$0xff]
  %v65 = vld [vmem:[%s1 + $0x18] sm:$0xff]
  %v74 = vlaneseq
  %v75 = vand.u32 %v74, 127
  %v76 = vperm.slane %v54, %v75
  %v77 = vadd.s32 %v75, 4294967288
  %v78 = vperm.slane %v55, %v77
  %vm79 = vcmask 130112
  %v80 = vsel %vm79, %v78, %v76
  %v81 = vadd.s32 %v75, 4294967280
  %v82 = vperm.slane %v56, %v81
  %vm83 = vcmask 195712
  %v84 = vsel %vm83, %v82, %v80
  %v85 = vadd.s32 %v75, 4294967272
  %v86 = vperm.slane %v57, %v85
  %vm87 = vcmask 261312
  %v88 = vsel %vm87, %v86, %v84
  %v89 = vperm.slane %v58, %v75
  %v90 = vperm.slane %v59, %v77
  %v91 = vsel %vm79, %v90, %v89
  %v92 = vperm.slane %v60, %v81
  %v93 = vsel %vm83, %v92, %v91
  %v94 = vperm.slane %v61, %v85
  %v95 = vsel %vm87, %v94, %v93
  %vm96 = vcmask 1041409
  %v97 = vsel %vm96, %v95, %v88
  %vm98 = vcmask 261120
  %v99 = vsel %vm98, %v97, 0
  %101 = vmatpush.msra.mxu0 0.0
  %102 = vmatpush.msra.mxu0 0.0
  %103 = vmatpush.msra.mxu0 0.0
  %104 = vmatpush.msra.mxu0 0.0
  %105 = vmatpush.msra.mxu0 0.0
  %106 = vmatpush.msra.mxu0 0.0
  %107 = vmatpush.msra.mxu0 0.0
  %108 = vmatpush.msra.mxu0 0.0
  %109 = vmatpush.msra.mxu0 0.0
  %110 = vmatpush.msra.mxu0 0.0
  %111 = vmatpush.msra.mxu0 0.0
  %112 = vmatpush.msra.mxu0 0.0
  %113 = vmatpush.msra.mxu0 %v65
  %114 = vmatpush.msra.mxu0 %v64
  %115 = vmatpush.msra.mxu0 %v63
  %116 = vmatpush.msra.mxu0 %v62
  %117 = vmatmul.f32.gmra.mxu0 %v99
  %v118 = vpop.f32.mrf.mxu0
  %v119 = vadd.f32 0.0, %v118
  %120 = vdwg.mxu0
  %v121 = vmax.f32 %v119, 0.0
  %v122 = vld [vmem:[%s2] sm:$0x3]
  %vm123 = vcmask 15360
  %v125 = vsel %vm123, %v121, 0
  %vm127 = vcmask 1041408
  %v129 = vsel %vm127, %v122, 0
  %131 = vmatpush.msra.mxu0 0.0
  %132 = vmatpush.msra.mxu0 0.0
  %133 = vmatpush.msra.mxu0 0.0
  %134 = vmatpush.msra.mxu0 0.0
  %135 = vmatpush.msra.mxu0 0.0
  %136 = vmatpush.msra.mxu0 0.0
  %137 = vmatpush.msra.mxu0 0.0
  %138 = vmatpush.msra.mxu0 0.0
  %139 = vmatpush.msra.mxu0 0.0
  %140 = vmatpush.msra.mxu0 0.0
  %141 = vmatpush.msra.mxu0 0.0
  %142 = vmatpush.msra.mxu0 0.0
  %143 = vmatpush.msra.mxu0 0.0
  %144 = vmatpush.msra.mxu0 0.0
  %145 = vmatpush.msra.mxu0 0.0
  %146 = vmatpush.msra.mxu0 %v129
  %147 = vmatmul.f32.gmra.mxu0 %v125
  %v148 = vpop.f32.mrf.mxu0
  %v149 = vadd.f32 0.0, %v148
  %150 = vdwg.mxu0
  %v151 = vsub.f32 0.0, %v149
  %v152 = vmul.f32 %v151, 1.442695
  %v153 = vpow.pop %v152
  %v154 = vadd.f32 %v153, 1.0
  %v155 = vrcp.pop %v154
  %v156 = vmul.f32 %v154, %v155
  %v157 = vsub.f32 1.0, %v156
  %v158 = vmul.f32 %v155, %v157
  %v159 = vadd.f32 %v155, %v158
  %vm160 = vweird.f32 %v154
  %vm161 = vweird.f32 %v155
  %vm162 = vmor %vm160, %vm161
  %v163 = vsel %vm162, %v155, %v159
  %v164 = vand.u32 2147483647, %v154
  %vm165 = vcmp.eq.f32.partialorder %v164, 8.507059e+37
  %v166 = vand.u32 %v154, 2147483648
  %v167 = vor.u32 1.1754944e-38, %v166
  %v168 = vsel %vm165, %v167, %v163
  %v169 = vmul.f32 1.0, %v168
  %v170 = vperm.slane %v169, 0
  %v171 = vlaneseq
  %v172 = vshrl.u32 %v171, 7
  %174 = vset.pattern.permute.xlu0 %v172
  %175 = vperm.xlu0 %174, %v170
  %v176 = vpop.permute.xlu0 %175
  %v177 = vlaneseq
  %v178 = vshrl.u32 %v177, 7
  %v179 = vadd.s32 %v178, 8
  %180 = vset.pattern.permute.xlu0 %v179
  %181 = vperm.xlu0 %180, %v170
  %v182 = vpop.permute.xlu0 %181
  %v183 = vlaneseq
  %v184 = vshrl.u32 %v183, 7
  %v185 = vadd.s32 %v184, 16
  %186 = vset.pattern.permute.xlu0 %v185
  %187 = vperm.xlu0 %186, %v170
  %v188 = vpop.permute.xlu0 %187
  %v189 = vlaneseq
  %v190 = vshrl.u32 %v189, 7
  %v191 = vadd.s32 %v190, 24
  %192 = vset.pattern.permute.xlu0 %v191
  %193 = vperm.xlu0 %192, %v170
  %v194 = vpop.permute.xlu0 %193
  %v195 = vperm.slane %v169, 1
  %v196 = vlaneseq
  %v197 = vshrl.u32 %v196, 7
  %199 = vset.pattern.permute.xlu0 %v197
  %200 = vperm.xlu0 %199, %v195
  %v201 = vpop.permute.xlu0 %200
  %v202 = vlaneseq
  %v203 = vshrl.u32 %v202, 7
  %v204 = vadd.s32 %v203, 8
  %205 = vset.pattern.permute.xlu0 %v204
  %206 = vperm.xlu0 %205, %v195
  %v207 = vpop.permute.xlu0 %206
  %v208 = vlaneseq
  %v209 = vshrl.u32 %v208, 7
  %v210 = vadd.s32 %v209, 16
  %211 = vset.pattern.permute.xlu0 %v210
  %212 = vperm.xlu0 %211, %v195
  %v213 = vpop.permute.xlu0 %212
  %v214 = vlaneseq
  %v215 = vshrl.u32 %v214, 7
  %v216 = vadd.s32 %v215, 24
  %217 = vset.pattern.permute.xlu0 %v216
  %218 = vperm.xlu0 %217, %v195
  %v219 = vpop.permute.xlu0 %218
  %v220 = vmul.f32 %v14, %v176
  %v221 = vmul.f32 %v15, %v176
  %v222 = vmul.f32 %v16, %v182
  %v223 = vmul.f32 %v17, %v182
  %v224 = vmul.f32 %v18, %v188
  %v225 = vmul.f32 %v19, %v188
  %v226 = vmul.f32 %v20, %v194
  %v227 = vmul.f32 %v21, %v194
  %v228 = vmul.f32 %v22, %v201
  %v229 = vmul.f32 %v23, %v201
  %v230 = vmul.f32 %v24, %v207
  %v231 = vmul.f32 %v25, %v207
  %v232 = vmul.f32 %v26, %v213
  %v233 = vmul.f32 %v27, %v213
  %v234 = vmul.f32 %v28, %v219
  %v235 = vmul.f32 %v29, %v219
  %236 = vst [vmem:[%s3] sm:$0xff] %v220
  %237 = vst [vmem:[%s3 + $0x8] sm:$0xff] %v221
  %238 = vst [vmem:[%s3 + $0x10] sm:$0xff] %v222
  %239 = vst [vmem:[%s3 + $0x18] sm:$0xff] %v223
  %240 = vst [vmem:[%s3 + $0x20] sm:$0xff] %v224
  %241 = vst [vmem:[%s3 + $0x28] sm:$0xff] %v225
  %242 = vst [vmem:[%s3 + $0x30] sm:$0xff] %v226
  %243 = vst [vmem:[%s3 + $0x38] sm:$0xff] %v227
  %244 = vst [vmem:[%s3 + $0x40] sm:$0xff] %v228
  %245 = vst [vmem:[%s3 + $0x48] sm:$0xff] %v229
  %246 = vst [vmem:[%s3 + $0x50] sm:$0xff] %v230
  %247 = vst [vmem:[%s3 + $0x58] sm:$0xff] %v231
  %248 = vst [vmem:[%s3 + $0x60] sm:$0xff] %v232
  %249 = vst [vmem:[%s3 + $0x68] sm:$0xff] %v233
  %250 = vst [vmem:[%s3 + $0x70] sm:$0xff] %v234
  %251 = vst [vmem:[%s3 + $0x78] sm:$0xff] %v235
  // Predicated region
  $region14: #{se_block.1} parent=0 // pred_check
    _
  $region15: #{se_block.1} parent=0 // pred_check_branch
    %253 = sbr.rel (0) target = $region17
  $region16: #{se_block.1} parent=0 // pred_region
    _
  $region17: #{se_block.1} parent=0 // pred_fallthru
    _
  // Predicated region
  $region18: #{se_block.1} parent=0 // pred_check
    _
  $region19: #{se_block.1} parent=0 // pred_check_branch
    %255 = sbr.rel (0) target = $region21
  $region20: #{se_block.1} parent=0 // pred_region
    _
  $region21: #{se_block.1} parent=0 // pred_fallthru
    _

</llo_original>
